<compile_context>
chip_gen: v7x
topology: tpu7x:2x2x1
jax: 0.10.0
libtpu: 0.0.40
codegen_flags: <defaults>
</compile_context>

<pallas_src>
import functools

import jax
import jax.numpy as jnp
from jax.experimental import pallas as pl
from jax.experimental.pallas import tpu as pltpu


def _round_up(v, m):
    return (v + m - 1) // m * m


def _vmem_budget_bytes():
    cap = 128 * 1024 * 1024
    try:
        info = pltpu.get_tpu_info()
        cap = int(getattr(info, "vmem_capacity_bytes", cap) or cap)
    except Exception:
        pass
    # Leave headroom; 96 MiB ceiling on 128 MiB parts (v5e/v6e), ~48 MiB on v7x.
    return min(cap * 3 // 4, 96 * 1024 * 1024)


def _pick_tk(h_pad):
    for c in (1024, 512, 256, 128):
        if h_pad % c == 0:
            return c
    return 128


def _pick_tn(o_pad):
    # Prefer >= 2 output tiles so the parallel j axis can split across cores.
    for c in (512, 256, 128):
        if o_pad % c == 0 and o_pad // c >= 2:
            return c
    return 128


def _plan_bytes(tm, tn, tk, h_pad, x_full_h):
    bx = 2 * tm * (h_pad if x_full_h else tk) * 4   # x tile, double buffered
    bw = 2 * tk * tn * 4                            # W tile, double buffered
    bo = 2 * tm * tn * 4 + tm * tn * 4              # out double buf + f32 acc
    bb = 2 * tn * 4                                 # bias
    return bx + bw + bo + bb


def _tp_matmul_kernel(x_ref, w_ref, b_ref, out_ref, acc_ref, *, x_full_h, tk):
    """grid = (row_tiles m, out_tiles j, k_tiles k); K (reduction) innermost."""
    k = pl.program_id(2)

    @pl.when(k == 0)
    def _():
        acc_ref[...] = jnp.zeros_like(acc_ref)

    if x_full_h:
        # x block holds the full padded-H slice of this row tile; take the
        # K-slice for this step (lane-aligned dynamic slice, tk % 128 == 0).
        col0 = pl.multiple_of(k * tk, tk)
        x_tile = x_ref[:, pl.ds(col0, tk)]
    else:
        x_tile = x_ref[...]

    acc_ref[...] += jnp.dot(
        x_tile, w_ref[...],
        preferred_element_type=jnp.float32,
        precision=jax.lax.Precision.HIGHEST,
    )

    @pl.when(k == pl.num_programs(2) - 1)
    def _():
        out_ref[...] = (acc_ref[...] + b_ref[...]).astype(out_ref.dtype)


def tp_forward_wrapper(x, weight, bias, indices):
    """Pallas equivalent of TPForwardWrapper(Linear(H, O), indices)(x).

    x:       [B, H] float32
    weight:  [O, H] float32   (PyTorch Linear layout)
    bias:    [O]    float32
    indices: [N]    int       (rows of the model output to keep)
    returns: [N, O] float32 = (x @ W.T + b)[indices, :]
    """
    B, H = x.shape
    O = weight.shape[0]
    N = indices.shape[0]

    # ---- padded extents / tile sizes (every block (8, 128)-aligned) --------
    h_pad = _round_up(H, 128)
    o_pad = _round_up(O, 128)
    tk = _pick_tk(h_pad)
    tn = _pick_tn(o_pad)
    if N <= 256:
        n_pad = _round_up(N, 8)
    else:
        n_pad = _round_up(N, 256)
    tm = min(n_pad, 256)

    budget = _vmem_budget_bytes()
    x_full_h = _plan_bytes(tm, tn, tk, h_pad, True) <= budget
    while _plan_bytes(tm, tn, tk, h_pad, x_full_h) > budget and (tk > 128 or tn > 128):
        if tk > 128:
            tk //= 2
        else:
            tn //= 2

    # ---- wrapper-side prep --------------------------------------------------
    # Gather the N selected rows once (single contiguous slab); the kernel then
    # streams only those rows, once per m-tile, via BlockSpec pipelining.
    idx = jnp.clip(indices.astype(jnp.int32), 0, B - 1)
    x_sel = jnp.take(x, idx, axis=0)                                  # [N, H]
    x_sel = jnp.pad(x_sel, ((0, n_pad - N), (0, h_pad - H)))

    # One-time transpose to [H, O] so the MXU contraction needs no transpose.
    w_t = jnp.pad(weight.T, ((0, h_pad - H), (0, o_pad - O)))          # [H, O]
    b2d = jnp.pad(bias, (0, o_pad - O)).reshape(1, o_pad)

    grid = (n_pad // tm, o_pad // tn, h_pad // tk)

    if x_full_h:
        x_spec = pl.BlockSpec((tm, h_pad), lambda m, j, k: (m, 0))
    else:
        x_spec = pl.BlockSpec((tm, tk), lambda m, j, k: (m, k))

    grid_spec = pltpu.PrefetchScalarGridSpec(
        num_scalar_prefetch=0,
        grid=grid,
        in_specs=[
            x_spec,                                                 # gathered x
            pl.BlockSpec((tk, tn), lambda m, j, k: (k, j)),         # W^T tile
            pl.BlockSpec((1, tn), lambda m, j, k: (0, j)),          # bias
        ],
        out_specs=pl.BlockSpec((tm, tn), lambda m, j, k: (m, j)),
        scratch_shapes=[pltpu.VMEM((tm, tn), jnp.float32)],         # f32 acc
    )

    kernel = functools.partial(_tp_matmul_kernel, x_full_h=x_full_h, tk=tk)

    out_p = pl.pallas_call(
        kernel,
        out_shape=jax.ShapeDtypeStruct((n_pad, o_pad), x.dtype),
        grid_spec=grid_spec,
        compiler_params=pltpu.CompilerParams(
            dimension_semantics=("parallel", "parallel", "arbitrary"),
            vmem_limit_bytes=int(budget),
        ),
    )(x_sel, w_t, b2d)

    return out_p[:N, :O]


if __name__ == "__main__":
    key = jax.random.PRNGKey(0)
    kx, kw, kb, ki = jax.random.split(key, 4)

    # Deliberately unaligned H / O and N not a multiple of 8 to exercise the
    # padding path; small enough to run instantly.
    B, H, O, N = 16, 200, 200, 12
    x = jax.random.normal(kx, (B, H), dtype=jnp.float32)
    weight = jax.random.normal(kw, (O, H), dtype=jnp.float32) * 0.1
    bias = jax.random.normal(kb, (O,), dtype=jnp.float32) * 0.1
    indices = jax.random.randint(ki, (N,), 0, B, dtype=jnp.int32)

    out = tp_forward_wrapper(x, weight, bias, indices)
    out = jax.block_until_ready(out)

    # pure-JAX reference: model(x)[indices, :]
    ref = (x @ weight.T + bias)[indices, :]
    assert out.shape == ref.shape
    max_err = float(jnp.max(jnp.abs(out - ref)))
    assert jnp.allclose(out, ref, atol=1e-2, rtol=1e-2), max_err

    print("KERNEL_OK")
</pallas_src>

<mosaic_0001>
module attributes {stable_mosaic.version = 11 : i64} {
  func.func @_tp_matmul_kernel(%arg0: i32, %arg1: i32, %arg2: i32, %arg3: memref<16x256xf32, #tpu.memory_space<vmem>>, %arg4: memref<256x128xf32, #tpu.memory_space<vmem>>, %arg5: memref<1x128xf32, #tpu.memory_space<vmem>>, %arg6: memref<16x128xf32, #tpu.memory_space<vmem>>, %arg7: memref<16x128xf32, #tpu.memory_space<vmem>>) attributes {dimension_semantics = [#tpu.dimension_semantics<parallel>, #tpu.dimension_semantics<parallel>, #tpu.dimension_semantics<arbitrary>], iteration_bounds = array<i64: 1, 2, 1>, scalar_prefetch = 0 : i64, scratch_operands = 1 : i64, tpu.core_type = #tpu.core_type<tc>, window_params = [{transform_indices = @transform_0, window_bounds = array<i64: 16, 256>}, {transform_indices = @transform_1, window_bounds = array<i64: 256, 128>}, {transform_indices = @transform_2, window_bounds = array<i64: 1, 128>}, {transform_indices = @transform_3, window_bounds = array<i64: 16, 128>}]} {
    %c0_i32 = arith.constant 0 : i32
    %0 = arith.cmpi eq, %arg2, %c0_i32 : i32
    %1 = arith.extui %0 : i1 to i32
    %c0_i32_0 = arith.constant 0 : i32
    %2 = arith.cmpi ne, %1, %c0_i32_0 : i32
    scf.if %2 {
      %cst_9 = arith.constant 0.000000e+00 : f32
      %15 = vector.broadcast %cst_9 : f32 to vector<16x128xf32>
      %c0_10 = arith.constant 0 : index
      %c0_11 = arith.constant 0 : index
      %16 = vector.load %arg7[%c0_10, %c0_11] : memref<16x128xf32, #tpu.memory_space<vmem>>, vector<16x128xf32>
      tpu.vector_store %arg7[%c0_10, %c0_11], %15 {strides = array<i32>} : memref<16x128xf32, #tpu.memory_space<vmem>>, vector<16x128xf32>,
    } else {
    }
    %c256_i32 = arith.constant 256 : i32
    %3 = arith.muli %arg2, %c256_i32 : i32
    %4 = tpu.assume_multiple %3, 256 : i32
    %c0 = arith.constant 0 : index
    %5 = arith.index_cast %4 : i32 to index
    %6 = vector.load %arg3[%c0, %5] : memref<16x256xf32, #tpu.memory_space<vmem>>, vector<16x256xf32>
    %c0_1 = arith.constant 0 : index
    %c0_2 = arith.constant 0 : index
    %7 = vector.load %arg7[%c0_1, %c0_2] : memref<16x128xf32, #tpu.memory_space<vmem>>, vector<16x128xf32>
    %c0_3 = arith.constant 0 : index
    %c0_4 = arith.constant 0 : index
    %8 = vector.load %arg4[%c0_3, %c0_4] : memref<256x128xf32, #tpu.memory_space<vmem>>, vector<256x128xf32>
    %cst = arith.constant dense<0.000000e+00> : vector<16x128xf32>
    %9 = tpu.matmul %6, %8, %cst {dimension_numbers = #tpu.dot_dimension_numbers<[1], [0], [0], [1], [0, 0, 1, 1], [], []>, precision = #tpu.contract_precision<fp32>} : vector<16x256xf32>, vector<256x128xf32>, vector<16x128xf32> -> vector<16x128xf32>
    %10 = arith.addf %7, %9 : vector<16x128xf32>
    %c0_5 = arith.constant 0 : index
    %c0_6 = arith.constant 0 : index
    %11 = vector.load %arg7[%c0_5, %c0_6] : memref<16x128xf32, #tpu.memory_space<vmem>>, vector<16x128xf32>
    tpu.vector_store %arg7[%c0_5, %c0_6], %10 {strides = array<i32>} : memref<16x128xf32, #tpu.memory_space<vmem>>, vector<16x128xf32>,
    %c0_i32_7 = arith.constant 0 : i32
    %12 = arith.cmpi eq, %arg2, %c0_i32_7 : i32
    %13 = arith.extui %12 : i1 to i32
    %c0_i32_8 = arith.constant 0 : i32
    %14 = arith.cmpi ne, %13, %c0_i32_8 : i32
    scf.if %14 {
      %c0_9 = arith.constant 0 : index
      %c0_10 = arith.constant 0 : index
      %15 = vector.load %arg7[%c0_9, %c0_10] : memref<16x128xf32, #tpu.memory_space<vmem>>, vector<16x128xf32>
      %c0_11 = arith.constant 0 : index
      %c0_12 = arith.constant 0 : index
      %16 = vector.load %arg5[%c0_11, %c0_12] : memref<1x128xf32, #tpu.memory_space<vmem>>, vector<1x128xf32>
      %17 = vector.broadcast %16 : vector<1x128xf32> to vector<16x128xf32>
      %18 = arith.addf %15, %17 : vector<16x128xf32>
      %c0_13 = arith.constant 0 : index
      %c0_14 = arith.constant 0 : index
      %19 = vector.load %arg6[%c0_13, %c0_14] : memref<16x128xf32, #tpu.memory_space<vmem>>, vector<16x128xf32>
      tpu.vector_store %arg6[%c0_13, %c0_14], %18 {strides = array<i32>} : memref<16x128xf32, #tpu.memory_space<vmem>>, vector<16x128xf32>,
    } else {
    }
    return
  }
  func.func @transform_0(%arg0: i32, %arg1: i32, %arg2: i32) -> (i32, i32) {
    %c0_i32 = arith.constant 0 : i32
    %c0_i32_0 = arith.constant 0 : i32
    return %arg0, %c0_i32 : i32, i32
  }
  func.func @transform_1(%arg0: i32, %arg1: i32, %arg2: i32) -> (i32, i32) {
    %c0_i32 = arith.constant 0 : i32
    return %arg2, %arg1 : i32, i32
  }
  func.func @transform_2(%arg0: i32, %arg1: i32, %arg2: i32) -> (i32, i32) {
    %c0_i32 = arith.constant 0 : i32
    %c0_i32_0 = arith.constant 0 : i32
    return %c0_i32, %arg1 : i32, i32
  }
  func.func @transform_3(%arg0: i32, %arg1: i32, %arg2: i32) -> (i32, i32) {
    %c0_i32 = arith.constant 0 : i32
    return %arg0, %arg1 : i32, i32
  }
}

</mosaic_0001>

<llo_original>
// kernel: tpu_custom_call.1
$region0: #{tpu_custom_call.1}
  #allocation0 [shape = 'u32[]', space=smem, size = 0x4, offset = 0x4, fixed_abs, tag = 'smem constant byte address 0x4 - core index']
  #allocation1 [shape = 'u32[144,128]{1,0:T(1,128)}', space=vmem, size = 0x12000, scoped, tag = 'internal scratch']
  #allocation2 [shape = 'f32[16,128]{1,0:T(8,128)}', space=vmem, size = 0x2000, scoped, tag = 'scratch operand']
  %s0 = inlined_call_operand.hbm [shape: f32[16,256], index: 0, kind: input, shape index: {}]
  %s1 = inlined_call_operand.hbm [shape: f32[256,256], index: 1, kind: input, shape index: {}]
  %s2 = inlined_call_operand.hbm [shape: f32[1,256], index: 2, kind: input, shape index: {}]
  %s3 = inlined_call_operand.hbm [shape: f32[16,256], index: 3, kind: output, shape index: {}]
  %s4 = sld [smem:[#allocation0]]
  $region65: #{tpu_custom_call.1} parent=0
    _
  %s6 = ssub.s32 1, %s4
  %s7 = scalar_select 0, %s6, %s4
  $region1: #{tpu_custom_call.1} parent=0
    #allocation3 [shape = 'u8[16384]{0}', space=vmem, size = 0x4000, scoped, tag = 'input window, operand 0, single buffered']
    #allocation4 [shape = 's32[2]{0}', space=sflag, size = 0x8, scoped, tag = 'scoped memory for tpu_custom_call.1']
    #allocation5 [shape = 's32[2]{0}', space=sflag, size = 0x8, scoped, tag = 'scoped memory for tpu_custom_call.1']
    #allocation6 [shape = 'u8[262144]{0}', space=vmem, size = 0x40000, scoped, tag = 'input window, operand 1']
    #allocation7 [shape = 's32[2]{0}', space=sflag, size = 0x8, scoped, tag = 'scoped memory for tpu_custom_call.1']
    #allocation8 [shape = 'u8[1024]{0}', space=vmem, size = 0x400, scoped, tag = 'input window, operand 2']
    #allocation9 [shape = 'u8[16384]{0}', space=vmem, size = 0x4000, scoped, tag = 'output window, operand 0']
    %8 = vsyncpa [#allocation4], 0
    %9 = vsyncpa [#allocation7], 0
    %s10 = scalar_lea.sflag [#allocation7], 1
    %11 = vsyncpa %s10, 0
    %12 = vsyncpa [#allocation5], 0
    %s13 = scalar_lea.sflag [#allocation5], 1
    %14 = vsyncpa %s13, 0
    loop: start=0, step=1, limit=4
    $region2: #{tpu_custom_call.1} parent=1 // loop_pre_header
      _
    $region3: #{tpu_custom_call.1} parent=1 // loop_header
      %s16 = sphi 0, %s20
      %p17 = scmp.ge.s32.totalorder %s16, 4
      %s23 = sphi 0, %s42
      %s24 = sphi 0, %s38
      %s25 = sphi 0, %s34
      %s26 = sphi 0, %s23
      %s27 = sphi 0, %s24
      %s28 = sphi 0, %s25
      %s29 = sphi 0, %s26
      %s30 = sphi 0, %s27
      %s31 = sphi 0, %s28
      %s45 = sphi 0, %s47
      %s48 = sphi 0, %s45
      %s49 = sphi 0, %s48
      %s65 = sphi 0, %s49
      %s73 = sphi 0, %s75
      %s76 = sphi 0, %s73
      %s77 = sphi 0, %s76
      %s93 = sphi 0, %s77
      %s99 = sphi 0, %s101
      %s102 = sphi 0, %s99
      %s103 = sphi 0, %s102
      %s119 = sphi 0, %s103
      %s127 = sphi 0, %s129
      %s130 = sphi 0, %s127
      %s131 = sphi 0, %s130
      %s147 = sphi 0, %s131
    $region4: #{tpu_custom_call.1} parent=1 // loop_header_branch
      %19 = sbr.rel (%p17) target = $region8
    $region5: #{tpu_custom_call.1} parent=1 // loop_body
      %s21 = ssub.s32 %s16, 1
      %s22 = ssub.s32 %s16, 2
      %s32 = sadd.s32 1, %s25
      %p33 = scmp.ge.s32.totalorder %s32, 1
      %s34 = scalar_select %p33, 0, %s32
      %s35 = sadd.s32 1, %s24
      %s36 = scalar_select %p33, %s35, %s24
      %p37 = scmp.ge.s32.totalorder %s36, 2
      %s38 = scalar_select %p37, 0, %s36
      %s39 = sadd.s32 1, %s23
      %s40 = scalar_select %p37, %s39, %s23
      %p41 = scmp.ge.s32.totalorder %s40, 1
      %s42 = scalar_select %p41, 0, %s40
      %s43 = ssub.s32 %s23, %s42
      %p44 = scmp.eq.s32.totalorder %s43, 0
      %s46 = sadd.s32 %s45, 1
      %s47 = scalar_select %p44, %s45, %s46
      %p50 = pneg %p44
      %p51 = scmp.eq.s32.totalorder %s16, 1
      %p52 = por %p50, %p51
      %p53 = scmp.ne.s32.totalorder %s45, %s48
      %p54 = scmp.eq.s32.totalorder %s16, 0
      %p55 = por %p53, %p54
      %p56 = scmp.ne.s32.totalorder %s45, %s48
      %p57 = scmp.eq.s32.totalorder %s21, 1
      %p58 = por %p56, %p57
      %p59 = scmp.ne.s32.totalorder %s48, %s49
      %p60 = scmp.eq.s32.totalorder %s21, 0
      %p61 = por %p59, %p60
      %p62 = scmp.ne.s32.totalorder %s48, %s49
      %p63 = scmp.eq.s32.totalorder %s22, 1
      %p64 = por %p62, %p63
      %p66 = scmp.ne.s32.totalorder %s49, %s65
      %p67 = scmp.eq.s32.totalorder %s22, 0
      %p68 = por %p66, %p67
      %s69 = ssub.s32 %s25, %s34
      %s70 = ssub.s32 %s24, %s38
      %s71 = sor.u32 %s69, %s70
      %p72 = scmp.eq.s32.totalorder %s71, 0
      %s74 = sadd.s32 %s73, 1
      %s75 = scalar_select %p72, %s73, %s74
      %p78 = pneg %p72
      %p79 = scmp.eq.s32.totalorder %s16, 1
      %p80 = por %p78, %p79
      %p81 = scmp.ne.s32.totalorder %s73, %s76
      %p82 = scmp.eq.s32.totalorder %s16, 0
      %p83 = por %p81, %p82
      %p84 = scmp.ne.s32.totalorder %s73, %s76
      %p85 = scmp.eq.s32.totalorder %s21, 1
      %p86 = por %p84, %p85
      %p87 = scmp.ne.s32.totalorder %s76, %s77
      %p88 = scmp.eq.s32.totalorder %s21, 0
      %p89 = por %p87, %p88
      %p90 = scmp.ne.s32.totalorder %s76, %s77
      %p91 = scmp.eq.s32.totalorder %s22, 1
      %p92 = por %p90, %p91
      %p94 = scmp.ne.s32.totalorder %s77, %s93
      %p95 = scmp.eq.s32.totalorder %s22, 0
      %p96 = por %p94, %p95
      %s97 = ssub.s32 %s24, %s38
      %p98 = scmp.eq.s32.totalorder %s97, 0
      %s100 = sadd.s32 %s99, 1
      %s101 = scalar_select %p98, %s99, %s100
      %p104 = pneg %p98
      %p105 = scmp.eq.s32.totalorder %s16, 1
      %p106 = por %p104, %p105
      %p107 = scmp.ne.s32.totalorder %s99, %s102
      %p108 = scmp.eq.s32.totalorder %s16, 0
      %p109 = por %p107, %p108
      %p110 = scmp.ne.s32.totalorder %s99, %s102
      %p111 = scmp.eq.s32.totalorder %s21, 1
      %p112 = por %p110, %p111
      %p113 = scmp.ne.s32.totalorder %s102, %s103
      %p114 = scmp.eq.s32.totalorder %s21, 0
      %p115 = por %p113, %p114
      %p116 = scmp.ne.s32.totalorder %s102, %s103
      %p117 = scmp.eq.s32.totalorder %s22, 1
      %p118 = por %p116, %p117
      %p120 = scmp.ne.s32.totalorder %s103, %s119
      %p121 = scmp.eq.s32.totalorder %s22, 0
      %p122 = por %p120, %p121
      %s123 = ssub.s32 %s23, %s42
      %s124 = ssub.s32 %s24, %s38
      %s125 = sor.u32 %s123, %s124
      %p126 = scmp.eq.s32.totalorder %s125, 0
      %s128 = sadd.s32 %s127, 1
      %s129 = scalar_select %p126, %s127, %s128
      %p132 = pneg %p126
      %p133 = scmp.eq.s32.totalorder %s16, 1
      %p134 = por %p132, %p133
      %p135 = scmp.ne.s32.totalorder %s127, %s130
      %p136 = scmp.eq.s32.totalorder %s16, 0
      %p137 = por %p135, %p136
      %p138 = scmp.ne.s32.totalorder %s127, %s130
      %p139 = scmp.eq.s32.totalorder %s21, 1
      %p140 = por %p138, %p139
      %p141 = scmp.ne.s32.totalorder %s130, %s131
      %p142 = scmp.eq.s32.totalorder %s21, 0
      %p143 = por %p141, %p142
      %p144 = scmp.ne.s32.totalorder %s130, %s131
      %p145 = scmp.eq.s32.totalorder %s22, 1
      %p146 = por %p144, %p145
      %p148 = scmp.ne.s32.totalorder %s131, %s147
      %p149 = scmp.eq.s32.totalorder %s22, 0
      %p150 = por %p148, %p149
      %p151 = scmp.le.s32.totalorder 1, %s16
      %p152 = scmp.lt.s32.totalorder %s16, 3
      %p153 = pnand %p151, %p152
      %p154 = pneg %p153
      // Predicated region
      $region9: #{tpu_custom_call.1} parent=5 // pred_check
        _
      $region10: #{tpu_custom_call.1} parent=5 // pred_check_branch
        %156 = sbr.rel (%p153) target = $region12
      $region11: #{tpu_custom_call.1} parent=5 // pred_region
        %s157 = ssub.s32 %s16, 1
        // Predicated region
        $region13: #{tpu_custom_call.1} parent=11 // pred_check
          %p158 = pneg %p61
        $region14: #{tpu_custom_call.1} parent=11 // pred_check_branch
          %160 = sbr.rel (%p158) target = $region16
        $region15: #{tpu_custom_call.1} parent=11 // pred_region
          %s161 = smul.u32 2, %s26
          %s163 = ssub.s32 512, 512
          %164 = vsyncadd [#allocation4], %s163
          %s165 = smul.addr %s161, 2
          %s166 = smul.addr %s165, 128
          %s167 = scalar_lea.hbm %s0, %s166
          %s168 = sshll.u32 [#allocation3], 4
          %s169 = int_to_ptr.vmem [resolvable:$true] %s168
          %174 = dma.hbm_to_vmem [thread:$0]  %s167, 512, %s169, [#allocation4], 256, 256, 16
        $region16: #{tpu_custom_call.1} parent=11 // pred_fallthru
          _
      $region12: #{tpu_custom_call.1} parent=5 // pred_fallthru
        _
      %p175 = scmp.lt.s32.totalorder %s16, 2
      // Predicated region
      $region17: #{tpu_custom_call.1} parent=5 // pred_check
        %p176 = pneg %p175
      $region18: #{tpu_custom_call.1} parent=5 // pred_check_branch
        %178 = sbr.rel (%p176) target = $region20
      $region19: #{tpu_custom_call.1} parent=5 // pred_region
        // Predicated region
        $region21: #{tpu_custom_call.1} parent=19 // pred_check
          %p179 = pneg %p83
        $region22: #{tpu_custom_call.1} parent=19 // pred_check_branch
          %181 = sbr.rel (%p179) target = $region24
        $region23: #{tpu_custom_call.1} parent=19 // pred_region
          %s182 = sand.u32 %s16, 1
          %s183 = scalar_lea.sflag [#allocation7], %s182
          %s184 = sand.u32 %s73, 1
          %s185 = smul.addr %s184, 256
          %s186 = scalar_lea.vmem [#allocation6], %s185
          %s187 = smul.u32 32, %s25
          %s189 = ssub.s32 4096, 4096
          %190 = vsyncadd %s183, %s189
          %s191 = smul.addr %s187, 2
          %s192 = sadd.s32 %s24, %s191
          %s193 = smul.addr %s192, 128
          %s194 = scalar_lea.hbm %s1, %s193
          %s195 = sshll.u32 %s186, 4
          %s196 = int_to_ptr.vmem [resolvable:$true] %s195
          %201 = dma.hbm_to_vmem [thread:$0]  %s194, 4096, %s196, %s183, 256, 128, 8
        $region24: #{tpu_custom_call.1} parent=19 // pred_fallthru
          _
        // Predicated region
        $region25: #{tpu_custom_call.1} parent=19 // pred_check
          %p202 = pneg %p109
        $region26: #{tpu_custom_call.1} parent=19 // pred_check_branch
          %204 = sbr.rel (%p202) target = $region28
        $region27: #{tpu_custom_call.1} parent=19 // pred_region
          %s205 = sand.u32 %s16, 1
          %s206 = scalar_lea.sflag [#allocation7], %s205
          %s207 = sand.u32 %s99, 1
          %s208 = scalar_lea.vmem [#allocation8], %s207
          %s210 = ssub.s32 16, 16
          %211 = vsyncadd %s206, %s210
          %s212 = smul.addr %s24, 16
          %s213 = scalar_lea.hbm %s2, %s212
          %s215 = sshll.u32 %s208, 4
          %s216 = int_to_ptr.vmem [resolvable:$true] %s215
          %218 = dma.hbm_to_vmem [thread:$0]  %s213, 16, %s216, %s206
        $region28: #{tpu_custom_call.1} parent=19 // pred_fallthru
          _
      $region20: #{tpu_custom_call.1} parent=5 // pred_fallthru
        _
      %p219 = scmp.le.s32.totalorder 1, %s16
      %p220 = scmp.lt.s32.totalorder %s16, 3
      %p221 = pnand %p219, %p220
      %p222 = pneg %p221
      // Predicated region
      $region29: #{tpu_custom_call.1} parent=5 // pred_check
        _
      $region30: #{tpu_custom_call.1} parent=5 // pred_check_branch
        %224 = sbr.rel (%p221) target = $region32
      $region31: #{tpu_custom_call.1} parent=5 // pred_region
        %s225 = ssub.s32 %s16, 1
        // Predicated region
        $region33: #{tpu_custom_call.1} parent=31 // pred_check
          %p226 = pneg %p61
        $region34: #{tpu_custom_call.1} parent=31 // pred_check_branch
          %228 = sbr.rel (%p226) target = $region36
        $region35: #{tpu_custom_call.1} parent=31 // pred_region
          %229 = dma.done [#allocation4], 512
        $region36: #{tpu_custom_call.1} parent=31 // pred_fallthru
          _
        %s230 = sand.u32 %s21, 1
        %s231 = scalar_lea.sflag [#allocation7], %s230
        %s232 = sand.u32 %s76, 1
        %s233 = smul.addr %s232, 256
        %s234 = scalar_lea.vmem [#allocation6], %s233
        // Predicated region
        $region37: #{tpu_custom_call.1} parent=31 // pred_check
          %p235 = pneg %p89
        $region38: #{tpu_custom_call.1} parent=31 // pred_check_branch
          %237 = sbr.rel (%p235) target = $region40
        $region39: #{tpu_custom_call.1} parent=31 // pred_region
          %238 = dma.done %s231, 4096
        $region40: #{tpu_custom_call.1} parent=31 // pred_fallthru
          _
        %s239 = sand.u32 %s21, 1
        %s240 = scalar_lea.sflag [#allocation7], %s239
        %s241 = sand.u32 %s102, 1
        %s242 = scalar_lea.vmem [#allocation8], %s241
        // Predicated region
        $region41: #{tpu_custom_call.1} parent=31 // pred_check
          %p243 = pneg %p115
        $region42: #{tpu_custom_call.1} parent=31 // pred_check_branch
          %245 = sbr.rel (%p243) target = $region44
        $region43: #{tpu_custom_call.1} parent=31 // pred_region
          %246 = dma.done %s240, 16
        $region44: #{tpu_custom_call.1} parent=31 // pred_fallthru
          _
        %p247 = pneg %p61
        %p248 = pneg %p58
        %s249 = sand.u32 %s21, 1
        %s250 = scalar_lea.sflag [#allocation7], %s249
        %s251 = sand.u32 %s76, 1
        %s252 = smul.addr %s251, 256
        %s253 = scalar_lea.vmem [#allocation6], %s252
        %p254 = pneg %p89
        %p255 = pneg %p86
        %s256 = sand.u32 %s21, 1
        %s257 = scalar_lea.sflag [#allocation7], %s256
        %s258 = sand.u32 %s102, 1
        %s259 = scalar_lea.vmem [#allocation8], %s258
        %p260 = pneg %p115
        %p261 = pneg %p112
        %p262 = pneg %p143
        %p263 = pneg %p140
        %s264 = sand.u32 %s130, 1
        %s265 = scalar_lea.sflag [#allocation5], %s264
        %s266 = sand.u32 %s130, 1
        %s267 = smul.addr %s266, 16
        %s268 = scalar_lea.vmem [#allocation9], %s267
        %s269 = smul.u32 2, %s26
        %s270 = smul.u32 32, %s28
        %s271 = smul.u32 2, %s26
        %p272 = scmp.eq.s32.totalorder %s28, 0
        // Predicated region
        $region45: #{tpu_custom_call.1} parent=31 // pred_check
          %p273 = pneg %p272
        $region46: #{tpu_custom_call.1} parent=31 // pred_check_branch
          %275 = sbr.rel (%p273) target = $region48
        $region47: #{tpu_custom_call.1} parent=31 // pred_region
          %276 = vst [vmem:[#allocation2] sm:$0xff] 0.0
          %277 = vst [vmem:[#allocation2 + $0x8] sm:$0xff] 0.0
        $region48: #{tpu_custom_call.1} parent=31 // pred_fallthru
          _
        %s278 = smul.u32 %s28, 256
        %s279 = sshra.s32 %s278, 7
        %s280 = sand.u32 %s278, 127
        %s281 = smul.addr %s279, 8
        %s282 = scalar_lea.vmem [#allocation3], %s281
        %v283 = vld [vmem:[%s282] sm:$0xff]
        %v284 = vld [vmem:[%s282 + $0x8] sm:$0xff]
        %v285 = vld [vmem:[%s282 + $0x10] sm:$0xff]
        %v286 = vld [vmem:[%s282 + $0x18] sm:$0xff]
        %v287 = vld [vmem:[#allocation2] sm:$0xff]
        %v288 = vld [vmem:[#allocation2 + $0x8] sm:$0xff]
        %v289 = vld [vmem:[%s234] sm:$0xff]
        %v290 = vld [vmem:[%s234 + $0x8] sm:$0xff]
        %v291 = vld [vmem:[%s234 + $0x10] sm:$0xff]
        %v292 = vld [vmem:[%s234 + $0x18] sm:$0xff]
        %v293 = vld [vmem:[%s234 + $0x20] sm:$0xff]
        %v294 = vld [vmem:[%s234 + $0x28] sm:$0xff]
        %v295 = vld [vmem:[%s234 + $0x30] sm:$0xff]
        %v296 = vld [vmem:[%s234 + $0x38] sm:$0xff]
        %v297 = vld [vmem:[%s234 + $0x40] sm:$0xff]
        %v298 = vld [vmem:[%s234 + $0x48] sm:$0xff]
        %v299 = vld [vmem:[%s234 + $0x50] sm:$0xff]
        %v300 = vld [vmem:[%s234 + $0x58] sm:$0xff]
        %v301 = vld [vmem:[%s234 + $0x60] sm:$0xff]
        %v302 = vld [vmem:[%s234 + $0x68] sm:$0xff]
        %v303 = vld [vmem:[%s234 + $0x70] sm:$0xff]
        %v304 = vld [vmem:[%s234 + $0x78] sm:$0xff]
        %v305 = vld [vmem:[%s234 + $0x80] sm:$0xff]
        %v306 = vld [vmem:[%s234 + $0x88] sm:$0xff]
        %v307 = vld [vmem:[%s234 + $0x90] sm:$0xff]
        %v308 = vld [vmem:[%s234 + $0x98] sm:$0xff]
        %v309 = vld [vmem:[%s234 + $0xa0] sm:$0xff]
        %v310 = vld [vmem:[%s234 + $0xa8] sm:$0xff]
        %v311 = vld [vmem:[%s234 + $0xb0] sm:$0xff]
        %v312 = vld [vmem:[%s234 + $0xb8] sm:$0xff]
        %v313 = vld [vmem:[%s234 + $0xc0] sm:$0xff]
        %v314 = vld [vmem:[%s234 + $0xc8] sm:$0xff]
        %v315 = vld [vmem:[%s234 + $0xd0] sm:$0xff]
        %v316 = vld [vmem:[%s234 + $0xd8] sm:$0xff]
        %v317 = vld [vmem:[%s234 + $0xe0] sm:$0xff]
        %v318 = vld [vmem:[%s234 + $0xe8] sm:$0xff]
        %v319 = vld [vmem:[%s234 + $0xf0] sm:$0xff]
        %v320 = vld [vmem:[%s234 + $0xf8] sm:$0xff]
        %321 = vmatprep.subr.mxu0 0.0
        %v322 = vand.u32 %v289, 4294901760
        %323 = vmatpush1.msra.mxu0 %v322
        %324 = vmatprep.subr.mxu0 0.0
        %v325 = vand.u32 %v290, 4294901760
        %326 = vmatpush1.msra.mxu0 %v325
        %327 = vmatprep.subr.mxu0 0.0
        %v328 = vand.u32 %v291, 4294901760
        %329 = vmatpush1.msra.mxu0 %v328
        %330 = vmatprep.subr.mxu0 0.0
        %v331 = vand.u32 %v292, 4294901760
        %332 = vmatpush1.msra.mxu0 %v331
        %333 = vmatprep.subr.mxu0 0.0
        %v334 = vand.u32 %v293, 4294901760
        %335 = vmatpush1.msra.mxu0 %v334
        %336 = vmatprep.subr.mxu0 0.0
        %v337 = vand.u32 %v294, 4294901760
        %338 = vmatpush1.msra.mxu0 %v337
        %339 = vmatprep.subr.mxu0 0.0
        %v340 = vand.u32 %v295, 4294901760
        %341 = vmatpush1.msra.mxu0 %v340
        %342 = vmatprep.subr.mxu0 0.0
        %v343 = vand.u32 %v296, 4294901760
        %344 = vmatpush1.msra.mxu0 %v343
        %345 = vmatprep.subr.mxu0 0.0
        %v346 = vand.u32 %v297, 4294901760
        %347 = vmatpush1.msra.mxu0 %v346
        %348 = vmatprep.subr.mxu0 0.0
        %v349 = vand.u32 %v298, 4294901760
        %350 = vmatpush1.msra.mxu0 %v349
        %351 = vmatprep.subr.mxu0 0.0
        %v352 = vand.u32 %v299, 4294901760
        %353 = vmatpush1.msra.mxu0 %v352
        %354 = vmatprep.subr.mxu0 0.0
        %v355 = vand.u32 %v300, 4294901760
        %356 = vmatpush1.msra.mxu0 %v355
        %357 = vmatprep.subr.mxu0 0.0
        %v358 = vand.u32 %v301, 4294901760
        %359 = vmatpush1.msra.mxu0 %v358
        %360 = vmatprep.subr.mxu0 0.0
        %v361 = vand.u32 %v302, 4294901760
        %362 = vmatpush1.msra.mxu0 %v361
        %363 = vmatprep.subr.mxu0 0.0
        %v364 = vand.u32 %v303, 4294901760
        %365 = vmatpush1.msra.mxu0 %v364
        %366 = vmatprep.subr.mxu0 0.0
        %v367 = vand.u32 %v304, 4294901760
        %368 = vmatpush1.msra.mxu0 %v367
        %369 = vmatprep.subr.mxu0 0.0
        %v370 = vand.u32 %v305, 4294901760
        %371 = vmatpush1.msra.mxu0 %v370
        %372 = vmatprep.subr.mxu0 0.0
        %v373 = vand.u32 %v306, 4294901760
        %374 = vmatpush1.msra.mxu0 %v373
        %375 = vmatprep.subr.mxu0 0.0
        %v376 = vand.u32 %v307, 4294901760
        %377 = vmatpush1.msra.mxu0 %v376
        %378 = vmatprep.subr.mxu0 0.0
        %v379 = vand.u32 %v308, 4294901760
        %380 = vmatpush1.msra.mxu0 %v379
        %381 = vmatprep.subr.mxu0 0.0
        %v382 = vand.u32 %v309, 4294901760
        %383 = vmatpush1.msra.mxu0 %v382
        %384 = vmatprep.subr.mxu0 0.0
        %v385 = vand.u32 %v310, 4294901760
        %386 = vmatpush1.msra.mxu0 %v385
        %387 = vmatprep.subr.mxu0 0.0
        %v388 = vand.u32 %v311, 4294901760
        %389 = vmatpush1.msra.mxu0 %v388
        %390 = vmatprep.subr.mxu0 0.0
        %v391 = vand.u32 %v312, 4294901760
        %392 = vmatpush1.msra.mxu0 %v391
        %393 = vmatprep.subr.mxu0 0.0
        %v394 = vand.u32 %v313, 4294901760
        %395 = vmatpush1.msra.mxu0 %v394
        %396 = vmatprep.subr.mxu0 0.0
        %v397 = vand.u32 %v314, 4294901760
        %398 = vmatpush1.msra.mxu0 %v397
        %399 = vmatprep.subr.mxu0 0.0
        %v400 = vand.u32 %v315, 4294901760
        %401 = vmatpush1.msra.mxu0 %v400
        %402 = vmatprep.subr.mxu0 0.0
        %v403 = vand.u32 %v316, 4294901760
        %404 = vmatpush1.msra.mxu0 %v403
        %405 = vmatprep.subr.mxu0 0.0
        %v406 = vand.u32 %v317, 4294901760
        %407 = vmatpush1.msra.mxu0 %v406
        %408 = vmatprep.subr.mxu0 0.0
        %v409 = vand.u32 %v318, 4294901760
        %410 = vmatpush1.msra.mxu0 %v409
        %411 = vmatprep.subr.mxu0 0.0
        %v412 = vand.u32 %v319, 4294901760
        %413 = vmatpush1.msra.mxu0 %v412
        %414 = vmatprep.subr.mxu0 0.0
        %v415 = vand.u32 %v320, 4294901760
        %416 = vmatpush1.msra.mxu0 %v415
        %v417 = vand.u32 %v284, 4294901760
        %v418 = vsub.f32 %v284, %v417
        %v419 = vand.u32 %v418, 4294901760
        %v420 = vsub.f32 %v418, %v419
        %v421 = vand.u32 %v420, 4294901760
        %422 = vmatprep.mubr.f32.mxu0 %v421
        %v423 = vand.u32 %v283, 4294901760
        %v424 = vsub.f32 %v283, %v423
        %v425 = vand.u32 %v424, 4294901760
        %v426 = vsub.f32 %v424, %v425
        %v427 = vand.u32 %v426, 4294901760
        %428 = vmatmul.mubr.f32.gmra.mrb[0].mxu0 %v427
        %v429 = vpop.f32.mrb[0].mxu0
        %v430 = vadd.f32 0.0, %v429
        %v431 = vpop.f32.mrb[0].mxu0
        %v432 = vand.u32 %v286, 4294901760
        %v433 = vsub.f32 %v286, %v432
        %v434 = vand.u32 %v433, 4294901760
        %v435 = vsub.f32 %v433, %v434
        %v436 = vand.u32 %v435, 4294901760
        %437 = vmatprep.mubr.f32.mxu0 %v436
        %v438 = vand.u32 %v285, 4294901760
        %v439 = vsub.f32 %v285, %v438
        %v440 = vand.u32 %v439, 4294901760
        %v441 = vsub.f32 %v439, %v440
        %v442 = vand.u32 %v441, 4294901760
        %443 = vmatmul.mubr.f32.gmra.mrb[0].mxu0 %v442
        %v444 = vpop.f32.mrb[0].mxu0
        %v445 = vadd.f32 0.0, %v444
        %v446 = vpop.f32.mrb[0].mxu0
        %447 = vdwg.mxu0
        %448 = vmatprep.subr.mxu0 0.0
        %v449 = vand.u32 %v289, 4294901760
        %v450 = vsub.f32 %v289, %v449
        %v451 = vand.u32 %v450, 4294901760
        %v452 = vsub.f32 %v450, %v451
        %v453 = vand.u32 %v452, 4294901760
        %454 = vmatpush1.msra.mxu0 %v453
        %455 = vmatprep.subr.mxu0 0.0
        %v456 = vand.u32 %v290, 4294901760
        %v457 = vsub.f32 %v290, %v456
        %v458 = vand.u32 %v457, 4294901760
        %v459 = vsub.f32 %v457, %v458
        %v460 = vand.u32 %v459, 4294901760
        %461 = vmatpush1.msra.mxu0 %v460
        %462 = vmatprep.subr.mxu0 0.0
        %v463 = vand.u32 %v291, 4294901760
        %v464 = vsub.f32 %v291, %v463
        %v465 = vand.u32 %v464, 4294901760
        %v466 = vsub.f32 %v464, %v465
        %v467 = vand.u32 %v466, 4294901760
        %468 = vmatpush1.msra.mxu0 %v467
        %469 = vmatprep.subr.mxu0 0.0
        %v470 = vand.u32 %v292, 4294901760
        %v471 = vsub.f32 %v292, %v470
        %v472 = vand.u32 %v471, 4294901760
        %v473 = vsub.f32 %v471, %v472
        %v474 = vand.u32 %v473, 4294901760
        %475 = vmatpush1.msra.mxu0 %v474
        %476 = vmatprep.subr.mxu0 0.0
        %v477 = vand.u32 %v293, 4294901760
        %v478 = vsub.f32 %v293, %v477
        %v479 = vand.u32 %v478, 4294901760
        %v480 = vsub.f32 %v478, %v479
        %v481 = vand.u32 %v480, 4294901760
        %482 = vmatpush1.msra.mxu0 %v481
        %483 = vmatprep.subr.mxu0 0.0
        %v484 = vand.u32 %v294, 4294901760
        %v485 = vsub.f32 %v294, %v484
        %v486 = vand.u32 %v485, 4294901760
        %v487 = vsub.f32 %v485, %v486
        %v488 = vand.u32 %v487, 4294901760
        %489 = vmatpush1.msra.mxu0 %v488
        %490 = vmatprep.subr.mxu0 0.0
        %v491 = vand.u32 %v295, 4294901760
        %v492 = vsub.f32 %v295, %v491
        %v493 = vand.u32 %v492, 4294901760
        %v494 = vsub.f32 %v492, %v493
        %v495 = vand.u32 %v494, 4294901760
        %496 = vmatpush1.msra.mxu0 %v495
        %497 = vmatprep.subr.mxu0 0.0
        %v498 = vand.u32 %v296, 4294901760
        %v499 = vsub.f32 %v296, %v498
        %v500 = vand.u32 %v499, 4294901760
        %v501 = vsub.f32 %v499, %v500
        %v502 = vand.u32 %v501, 4294901760
        %503 = vmatpush1.msra.mxu0 %v502
        %504 = vmatprep.subr.mxu0 0.0
        %v505 = vand.u32 %v297, 4294901760
        %v506 = vsub.f32 %v297, %v505
        %v507 = vand.u32 %v506, 4294901760
        %v508 = vsub.f32 %v506, %v507
        %v509 = vand.u32 %v508, 4294901760
        %510 = vmatpush1.msra.mxu0 %v509
        %511 = vmatprep.subr.mxu0 0.0
        %v512 = vand.u32 %v298, 4294901760
        %v513 = vsub.f32 %v298, %v512
        %v514 = vand.u32 %v513, 4294901760
        %v515 = vsub.f32 %v513, %v514
        %v516 = vand.u32 %v515, 4294901760
        %517 = vmatpush1.msra.mxu0 %v516
        %518 = vmatprep.subr.mxu0 0.0
        %v519 = vand.u32 %v299, 4294901760
        %v520 = vsub.f32 %v299, %v519
        %v521 = vand.u32 %v520, 4294901760
        %v522 = vsub.f32 %v520, %v521
        %v523 = vand.u32 %v522, 4294901760
        %524 = vmatpush1.msra.mxu0 %v523
        %525 = vmatprep.subr.mxu0 0.0
        %v526 = vand.u32 %v300, 4294901760
        %v527 = vsub.f32 %v300, %v526
        %v528 = vand.u32 %v527, 4294901760
        %v529 = vsub.f32 %v527, %v528
        %v530 = vand.u32 %v529, 4294901760
        %531 = vmatpush1.msra.mxu0 %v530
        %532 = vmatprep.subr.mxu0 0.0
        %v533 = vand.u32 %v301, 4294901760
        %v534 = vsub.f32 %v301, %v533
        %v535 = vand.u32 %v534, 4294901760
        %v536 = vsub.f32 %v534, %v535
        %v537 = vand.u32 %v536, 4294901760
        %538 = vmatpush1.msra.mxu0 %v537
        %539 = vmatprep.subr.mxu0 0.0
        %v540 = vand.u32 %v302, 4294901760
        %v541 = vsub.f32 %v302, %v540
        %v542 = vand.u32 %v541, 4294901760
        %v543 = vsub.f32 %v541, %v542
        %v544 = vand.u32 %v543, 4294901760
        %545 = vmatpush1.msra.mxu0 %v544
        %546 = vmatprep.subr.mxu0 0.0
        %v547 = vand.u32 %v303, 4294901760
        %v548 = vsub.f32 %v303, %v547
        %v549 = vand.u32 %v548, 4294901760
        %v550 = vsub.f32 %v548, %v549
        %v551 = vand.u32 %v550, 4294901760
        %552 = vmatpush1.msra.mxu0 %v551
        %553 = vmatprep.subr.mxu0 0.0
        %v554 = vand.u32 %v304, 4294901760
        %v555 = vsub.f32 %v304, %v554
        %v556 = vand.u32 %v555, 4294901760
        %v557 = vsub.f32 %v555, %v556
        %v558 = vand.u32 %v557, 4294901760
        %559 = vmatpush1.msra.mxu0 %v558
        %560 = vmatprep.subr.mxu0 0.0
        %v561 = vand.u32 %v305, 4294901760
        %v562 = vsub.f32 %v305, %v561
        %v563 = vand.u32 %v562, 4294901760
        %v564 = vsub.f32 %v562, %v563
        %v565 = vand.u32 %v564, 4294901760
        %566 = vmatpush1.msra.mxu0 %v565
        %567 = vmatprep.subr.mxu0 0.0
        %v568 = vand.u32 %v306, 4294901760
        %v569 = vsub.f32 %v306, %v568
        %v570 = vand.u32 %v569, 4294901760
        %v571 = vsub.f32 %v569, %v570
        %v572 = vand.u32 %v571, 4294901760
        %573 = vmatpush1.msra.mxu0 %v572
        %574 = vmatprep.subr.mxu0 0.0
        %v575 = vand.u32 %v307, 4294901760
        %v576 = vsub.f32 %v307, %v575
        %v577 = vand.u32 %v576, 4294901760
        %v578 = vsub.f32 %v576, %v577
        %v579 = vand.u32 %v578, 4294901760
        %580 = vmatpush1.msra.mxu0 %v579
        %581 = vmatprep.subr.mxu0 0.0
        %v582 = vand.u32 %v308, 4294901760
        %v583 = vsub.f32 %v308, %v582
        %v584 = vand.u32 %v583, 4294901760
        %v585 = vsub.f32 %v583, %v584
        %v586 = vand.u32 %v585, 4294901760
        %587 = vmatpush1.msra.mxu0 %v586
        %588 = vmatprep.subr.mxu0 0.0
        %v589 = vand.u32 %v309, 4294901760
        %v590 = vsub.f32 %v309, %v589
        %v591 = vand.u32 %v590, 4294901760
        %v592 = vsub.f32 %v590, %v591
        %v593 = vand.u32 %v592, 4294901760
        %594 = vmatpush1.msra.mxu0 %v593
        %595 = vmatprep.subr.mxu0 0.0
        %v596 = vand.u32 %v310, 4294901760
        %v597 = vsub.f32 %v310, %v596
        %v598 = vand.u32 %v597, 4294901760
        %v599 = vsub.f32 %v597, %v598
        %v600 = vand.u32 %v599, 4294901760
        %601 = vmatpush1.msra.mxu0 %v600
        %602 = vmatprep.subr.mxu0 0.0
        %v603 = vand.u32 %v311, 4294901760
        %v604 = vsub.f32 %v311, %v603
        %v605 = vand.u32 %v604, 4294901760
        %v606 = vsub.f32 %v604, %v605
        %v607 = vand.u32 %v606, 4294901760
        %608 = vmatpush1.msra.mxu0 %v607
        %609 = vmatprep.subr.mxu0 0.0
        %v610 = vand.u32 %v312, 4294901760
        %v611 = vsub.f32 %v312, %v610
        %v612 = vand.u32 %v611, 4294901760
        %v613 = vsub.f32 %v611, %v612
        %v614 = vand.u32 %v613, 4294901760
        %615 = vmatpush1.msra.mxu0 %v614
        %616 = vmatprep.subr.mxu0 0.0
        %v617 = vand.u32 %v313, 4294901760
        %v618 = vsub.f32 %v313, %v617
        %v619 = vand.u32 %v618, 4294901760
        %v620 = vsub.f32 %v618, %v619
        %v621 = vand.u32 %v620, 4294901760
        %622 = vmatpush1.msra.mxu0 %v621
        %623 = vmatprep.subr.mxu0 0.0
        %v624 = vand.u32 %v314, 4294901760
        %v625 = vsub.f32 %v314, %v624
        %v626 = vand.u32 %v625, 4294901760
        %v627 = vsub.f32 %v625, %v626
        %v628 = vand.u32 %v627, 4294901760
        %629 = vmatpush1.msra.mxu0 %v628
        %630 = vmatprep.subr.mxu0 0.0
        %v631 = vand.u32 %v315, 4294901760
        %v632 = vsub.f32 %v315, %v631
        %v633 = vand.u32 %v632, 4294901760
        %v634 = vsub.f32 %v632, %v633
        %v635 = vand.u32 %v634, 4294901760
        %636 = vmatpush1.msra.mxu0 %v635
        %637 = vmatprep.subr.mxu0 0.0
        %v638 = vand.u32 %v316, 4294901760
        %v639 = vsub.f32 %v316, %v638
        %v640 = vand.u32 %v639, 4294901760
        %v641 = vsub.f32 %v639, %v640
        %v642 = vand.u32 %v641, 4294901760
        %643 = vmatpush1.msra.mxu0 %v642
        %644 = vmatprep.subr.mxu0 0.0
        %v645 = vand.u32 %v317, 4294901760
        %v646 = vsub.f32 %v317, %v645
        %v647 = vand.u32 %v646, 4294901760
        %v648 = vsub.f32 %v646, %v647
        %v649 = vand.u32 %v648, 4294901760
        %650 = vmatpush1.msra.mxu0 %v649
        %651 = vmatprep.subr.mxu0 0.0
        %v652 = vand.u32 %v318, 4294901760
        %v653 = vsub.f32 %v318, %v652
        %v654 = vand.u32 %v653, 4294901760
        %v655 = vsub.f32 %v653, %v654
        %v656 = vand.u32 %v655, 4294901760
        %657 = vmatpush1.msra.mxu0 %v656
        %658 = vmatprep.subr.mxu0 0.0
        %v659 = vand.u32 %v319, 4294901760
        %v660 = vsub.f32 %v319, %v659
        %v661 = vand.u32 %v660, 4294901760
        %v662 = vsub.f32 %v660, %v661
        %v663 = vand.u32 %v662, 4294901760
        %664 = vmatpush1.msra.mxu0 %v663
        %665 = vmatprep.subr.mxu0 0.0
        %v666 = vand.u32 %v320, 4294901760
        %v667 = vsub.f32 %v320, %v666
        %v668 = vand.u32 %v667, 4294901760
        %v669 = vsub.f32 %v667, %v668
        %v670 = vand.u32 %v669, 4294901760
        %671 = vmatpush1.msra.mxu0 %v670
        %v672 = vand.u32 %v284, 4294901760
        %673 = vmatprep.mubr.f32.mxu0 %v672
        %v674 = vand.u32 %v283, 4294901760
        %675 = vmatmul.mubr.f32.gmra.mrb[0].mxu0 %v674
        %v676 = vpop.f32.mrb[0].mxu0
        %v677 = vadd.f32 %v430, %v676
        %v678 = vpop.f32.mrb[0].mxu0
        %v679 = vand.u32 %v286, 4294901760
        %680 = vmatprep.mubr.f32.mxu0 %v679
        %v681 = vand.u32 %v285, 4294901760
        %682 = vmatmul.mubr.f32.gmra.mrb[0].mxu0 %v681
        %v683 = vpop.f32.mrb[0].mxu0
        %v684 = vadd.f32 %v445, %v683
        %v685 = vpop.f32.mrb[0].mxu0
        %686 = vdwg.mxu0
        %687 = vmatprep.subr.mxu0 0.0
        %v688 = vand.u32 %v289, 4294901760
        %v689 = vsub.f32 %v289, %v688
        %690 = vmatpush1.msra.mxu0 %v689
        %691 = vmatprep.subr.mxu0 0.0
        %v692 = vand.u32 %v290, 4294901760
        %v693 = vsub.f32 %v290, %v692
        %694 = vmatpush1.msra.mxu0 %v693
        %695 = vmatprep.subr.mxu0 0.0
        %v696 = vand.u32 %v291, 4294901760
        %v697 = vsub.f32 %v291, %v696
        %698 = vmatpush1.msra.mxu0 %v697
        %699 = vmatprep.subr.mxu0 0.0
        %v700 = vand.u32 %v292, 4294901760
        %v701 = vsub.f32 %v292, %v700
        %702 = vmatpush1.msra.mxu0 %v701
        %703 = vmatprep.subr.mxu0 0.0
        %v704 = vand.u32 %v293, 4294901760
        %v705 = vsub.f32 %v293, %v704
        %706 = vmatpush1.msra.mxu0 %v705
        %707 = vmatprep.subr.mxu0 0.0
        %v708 = vand.u32 %v294, 4294901760
        %v709 = vsub.f32 %v294, %v708
        %710 = vmatpush1.msra.mxu0 %v709
        %711 = vmatprep.subr.mxu0 0.0
        %v712 = vand.u32 %v295, 4294901760
        %v713 = vsub.f32 %v295, %v712
        %714 = vmatpush1.msra.mxu0 %v713
        %715 = vmatprep.subr.mxu0 0.0
        %v716 = vand.u32 %v296, 4294901760
        %v717 = vsub.f32 %v296, %v716
        %718 = vmatpush1.msra.mxu0 %v717
        %719 = vmatprep.subr.mxu0 0.0
        %v720 = vand.u32 %v297, 4294901760
        %v721 = vsub.f32 %v297, %v720
        %722 = vmatpush1.msra.mxu0 %v721
        %723 = vmatprep.subr.mxu0 0.0
        %v724 = vand.u32 %v298, 4294901760
        %v725 = vsub.f32 %v298, %v724
        %726 = vmatpush1.msra.mxu0 %v725
        %727 = vmatprep.subr.mxu0 0.0
        %v728 = vand.u32 %v299, 4294901760
        %v729 = vsub.f32 %v299, %v728
        %730 = vmatpush1.msra.mxu0 %v729
        %731 = vmatprep.subr.mxu0 0.0
        %v732 = vand.u32 %v300, 4294901760
        %v733 = vsub.f32 %v300, %v732
        %734 = vmatpush1.msra.mxu0 %v733
        %735 = vmatprep.subr.mxu0 0.0
        %v736 = vand.u32 %v301, 4294901760
        %v737 = vsub.f32 %v301, %v736
        %738 = vmatpush1.msra.mxu0 %v737
        %739 = vmatprep.subr.mxu0 0.0
        %v740 = vand.u32 %v302, 4294901760
        %v741 = vsub.f32 %v302, %v740
        %742 = vmatpush1.msra.mxu0 %v741
        %743 = vmatprep.subr.mxu0 0.0
        %v744 = vand.u32 %v303, 4294901760
        %v745 = vsub.f32 %v303, %v744
        %746 = vmatpush1.msra.mxu0 %v745
        %747 = vmatprep.subr.mxu0 0.0
        %v748 = vand.u32 %v304, 4294901760
        %v749 = vsub.f32 %v304, %v748
        %750 = vmatpush1.msra.mxu0 %v749
        %751 = vmatprep.subr.mxu0 0.0
        %v752 = vand.u32 %v305, 4294901760
        %v753 = vsub.f32 %v305, %v752
        %754 = vmatpush1.msra.mxu0 %v753
        %755 = vmatprep.subr.mxu0 0.0
        %v756 = vand.u32 %v306, 4294901760
        %v757 = vsub.f32 %v306, %v756
        %758 = vmatpush1.msra.mxu0 %v757
        %759 = vmatprep.subr.mxu0 0.0
        %v760 = vand.u32 %v307, 4294901760
        %v761 = vsub.f32 %v307, %v760
        %762 = vmatpush1.msra.mxu0 %v761
        %763 = vmatprep.subr.mxu0 0.0
        %v764 = vand.u32 %v308, 4294901760
        %v765 = vsub.f32 %v308, %v764
        %766 = vmatpush1.msra.mxu0 %v765
        %767 = vmatprep.subr.mxu0 0.0
        %v768 = vand.u32 %v309, 4294901760
        %v769 = vsub.f32 %v309, %v768
        %770 = vmatpush1.msra.mxu0 %v769
        %771 = vmatprep.subr.mxu0 0.0
        %v772 = vand.u32 %v310, 4294901760
        %v773 = vsub.f32 %v310, %v772
        %774 = vmatpush1.msra.mxu0 %v773
        %775 = vmatprep.subr.mxu0 0.0
        %v776 = vand.u32 %v311, 4294901760
        %v777 = vsub.f32 %v311, %v776
        %778 = vmatpush1.msra.mxu0 %v777
        %779 = vmatprep.subr.mxu0 0.0
        %v780 = vand.u32 %v312, 4294901760
        %v781 = vsub.f32 %v312, %v780
        %782 = vmatpush1.msra.mxu0 %v781
        %783 = vmatprep.subr.mxu0 0.0
        %v784 = vand.u32 %v313, 4294901760
        %v785 = vsub.f32 %v313, %v784
        %786 = vmatpush1.msra.mxu0 %v785
        %787 = vmatprep.subr.mxu0 0.0
        %v788 = vand.u32 %v314, 4294901760
        %v789 = vsub.f32 %v314, %v788
        %790 = vmatpush1.msra.mxu0 %v789
        %791 = vmatprep.subr.mxu0 0.0
        %v792 = vand.u32 %v315, 4294901760
        %v793 = vsub.f32 %v315, %v792
        %794 = vmatpush1.msra.mxu0 %v793
        %795 = vmatprep.subr.mxu0 0.0
        %v796 = vand.u32 %v316, 4294901760
        %v797 = vsub.f32 %v316, %v796
        %798 = vmatpush1.msra.mxu0 %v797
        %799 = vmatprep.subr.mxu0 0.0
        %v800 = vand.u32 %v317, 4294901760
        %v801 = vsub.f32 %v317, %v800
        %802 = vmatpush1.msra.mxu0 %v801
        %803 = vmatprep.subr.mxu0 0.0
        %v804 = vand.u32 %v318, 4294901760
        %v805 = vsub.f32 %v318, %v804
        %806 = vmatpush1.msra.mxu0 %v805
        %807 = vmatprep.subr.mxu0 0.0
        %v808 = vand.u32 %v319, 4294901760
        %v809 = vsub.f32 %v319, %v808
        %810 = vmatpush1.msra.mxu0 %v809
        %811 = vmatprep.subr.mxu0 0.0
        %v812 = vand.u32 %v320, 4294901760
        %v813 = vsub.f32 %v320, %v812
        %814 = vmatpush1.msra.mxu0 %v813
        %v815 = vand.u32 %v284, 4294901760
        %v816 = vsub.f32 %v284, %v815
        %817 = vmatprep.mubr.f32.mxu0 %v816
        %v818 = vand.u32 %v283, 4294901760
        %v819 = vsub.f32 %v283, %v818
        %820 = vmatmul.mubr.f32.gmra.mrb[0].mxu0 %v819
        %v821 = vpop.f32.mrb[0].mxu0
        %v822 = vadd.f32 %v677, %v821
        %v823 = vpop.f32.mrb[0].mxu0
        %v824 = vand.u32 %v286, 4294901760
        %v825 = vsub.f32 %v286, %v824
        %826 = vmatprep.mubr.f32.mxu0 %v825
        %v827 = vand.u32 %v285, 4294901760
        %v828 = vsub.f32 %v285, %v827
        %829 = vmatmul.mubr.f32.gmra.mrb[0].mxu0 %v828
        %v830 = vpop.f32.mrb[0].mxu0
        %v831 = vadd.f32 %v684, %v830
        %v832 = vpop.f32.mrb[0].mxu0
        %833 = vdwg.mxu0
        %834 = vmatprep.subr.mxu0 0.0
        %v835 = vand.u32 %v289, 4294901760
        %836 = vmatpush1.msra.mxu0 %v835
        %837 = vmatprep.subr.mxu0 0.0
        %v838 = vand.u32 %v290, 4294901760
        %839 = vmatpush1.msra.mxu0 %v838
        %840 = vmatprep.subr.mxu0 0.0
        %v841 = vand.u32 %v291, 4294901760
        %842 = vmatpush1.msra.mxu0 %v841
        %843 = vmatprep.subr.mxu0 0.0
        %v844 = vand.u32 %v292, 4294901760
        %845 = vmatpush1.msra.mxu0 %v844
        %846 = vmatprep.subr.mxu0 0.0
        %v847 = vand.u32 %v293, 4294901760
        %848 = vmatpush1.msra.mxu0 %v847
        %849 = vmatprep.subr.mxu0 0.0
        %v850 = vand.u32 %v294, 4294901760
        %851 = vmatpush1.msra.mxu0 %v850
        %852 = vmatprep.subr.mxu0 0.0
        %v853 = vand.u32 %v295, 4294901760
        %854 = vmatpush1.msra.mxu0 %v853
        %855 = vmatprep.subr.mxu0 0.0
        %v856 = vand.u32 %v296, 4294901760
        %857 = vmatpush1.msra.mxu0 %v856
        %858 = vmatprep.subr.mxu0 0.0
        %v859 = vand.u32 %v297, 4294901760
        %860 = vmatpush1.msra.mxu0 %v859
        %861 = vmatprep.subr.mxu0 0.0
        %v862 = vand.u32 %v298, 4294901760
        %863 = vmatpush1.msra.mxu0 %v862
        %864 = vmatprep.subr.mxu0 0.0
        %v865 = vand.u32 %v299, 4294901760
        %866 = vmatpush1.msra.mxu0 %v865
        %867 = vmatprep.subr.mxu0 0.0
        %v868 = vand.u32 %v300, 4294901760
        %869 = vmatpush1.msra.mxu0 %v868
        %870 = vmatprep.subr.mxu0 0.0
        %v871 = vand.u32 %v301, 4294901760
        %872 = vmatpush1.msra.mxu0 %v871
        %873 = vmatprep.subr.mxu0 0.0
        %v874 = vand.u32 %v302, 4294901760
        %875 = vmatpush1.msra.mxu0 %v874
        %876 = vmatprep.subr.mxu0 0.0
        %v877 = vand.u32 %v303, 4294901760
        %878 = vmatpush1.msra.mxu0 %v877
        %879 = vmatprep.subr.mxu0 0.0
        %v880 = vand.u32 %v304, 4294901760
        %881 = vmatpush1.msra.mxu0 %v880
        %882 = vmatprep.subr.mxu0 0.0
        %v883 = vand.u32 %v305, 4294901760
        %884 = vmatpush1.msra.mxu0 %v883
        %885 = vmatprep.subr.mxu0 0.0
        %v886 = vand.u32 %v306, 4294901760
        %887 = vmatpush1.msra.mxu0 %v886
        %888 = vmatprep.subr.mxu0 0.0
        %v889 = vand.u32 %v307, 4294901760
        %890 = vmatpush1.msra.mxu0 %v889
        %891 = vmatprep.subr.mxu0 0.0
        %v892 = vand.u32 %v308, 4294901760
        %893 = vmatpush1.msra.mxu0 %v892
        %894 = vmatprep.subr.mxu0 0.0
        %v895 = vand.u32 %v309, 4294901760
        %896 = vmatpush1.msra.mxu0 %v895
        %897 = vmatprep.subr.mxu0 0.0
        %v898 = vand.u32 %v310, 4294901760
        %899 = vmatpush1.msra.mxu0 %v898
        %900 = vmatprep.subr.mxu0 0.0
        %v901 = vand.u32 %v311, 4294901760
        %902 = vmatpush1.msra.mxu0 %v901
        %903 = vmatprep.subr.mxu0 0.0
        %v904 = vand.u32 %v312, 4294901760
        %905 = vmatpush1.msra.mxu0 %v904
        %906 = vmatprep.subr.mxu0 0.0
        %v907 = vand.u32 %v313, 4294901760
        %908 = vmatpush1.msra.mxu0 %v907
        %909 = vmatprep.subr.mxu0 0.0
        %v910 = vand.u32 %v314, 4294901760
        %911 = vmatpush1.msra.mxu0 %v910
        %912 = vmatprep.subr.mxu0 0.0
        %v913 = vand.u32 %v315, 4294901760
        %914 = vmatpush1.msra.mxu0 %v913
        %915 = vmatprep.subr.mxu0 0.0
        %v916 = vand.u32 %v316, 4294901760
        %917 = vmatpush1.msra.mxu0 %v916
        %918 = vmatprep.subr.mxu0 0.0
        %v919 = vand.u32 %v317, 4294901760
        %920 = vmatpush1.msra.mxu0 %v919
        %921 = vmatprep.subr.mxu0 0.0
        %v922 = vand.u32 %v318, 4294901760
        %923 = vmatpush1.msra.mxu0 %v922
        %924 = vmatprep.subr.mxu0 0.0
        %v925 = vand.u32 %v319, 4294901760
        %926 = vmatpush1.msra.mxu0 %v925
        %927 = vmatprep.subr.mxu0 0.0
        %v928 = vand.u32 %v320, 4294901760
        %929 = vmatpush1.msra.mxu0 %v928
        %v930 = vand.u32 %v284, 4294901760
        %v931 = vsub.f32 %v284, %v930
        %v932 = vand.u32 %v931, 4294901760
        %933 = vmatprep.mubr.f32.mxu0 %v932
        %v934 = vand.u32 %v283, 4294901760
        %v935 = vsub.f32 %v283, %v934
        %v936 = vand.u32 %v935, 4294901760
        %937 = vmatmul.mubr.f32.gmra.mrb[0].mxu0 %v936
        %v938 = vpop.f32.mrb[0].mxu0
        %v939 = vadd.f32 %v822, %v938
        %v940 = vpop.f32.mrb[0].mxu0
        %v941 = vand.u32 %v286, 4294901760
        %v942 = vsub.f32 %v286, %v941
        %v943 = vand.u32 %v942, 4294901760
        %944 = vmatprep.mubr.f32.mxu0 %v943
        %v945 = vand.u32 %v285, 4294901760
        %v946 = vsub.f32 %v285, %v945
        %v947 = vand.u32 %v946, 4294901760
        %948 = vmatmul.mubr.f32.gmra.mrb[0].mxu0 %v947
        %v949 = vpop.f32.mrb[0].mxu0
        %v950 = vadd.f32 %v831, %v949
        %v951 = vpop.f32.mrb[0].mxu0
        %952 = vdwg.mxu0
        %953 = vmatprep.subr.mxu0 0.0
        %v954 = vand.u32 %v289, 4294901760
        %v955 = vsub.f32 %v289, %v954
        %v956 = vand.u32 %v955, 4294901760
        %957 = vmatpush1.msra.mxu0 %v956
        %958 = vmatprep.subr.mxu0 0.0
        %v959 = vand.u32 %v290, 4294901760
        %v960 = vsub.f32 %v290, %v959
        %v961 = vand.u32 %v960, 4294901760
        %962 = vmatpush1.msra.mxu0 %v961
        %963 = vmatprep.subr.mxu0 0.0
        %v964 = vand.u32 %v291, 4294901760
        %v965 = vsub.f32 %v291, %v964
        %v966 = vand.u32 %v965, 4294901760
        %967 = vmatpush1.msra.mxu0 %v966
        %968 = vmatprep.subr.mxu0 0.0
        %v969 = vand.u32 %v292, 4294901760
        %v970 = vsub.f32 %v292, %v969
        %v971 = vand.u32 %v970, 4294901760
        %972 = vmatpush1.msra.mxu0 %v971
        %973 = vmatprep.subr.mxu0 0.0
        %v974 = vand.u32 %v293, 4294901760
        %v975 = vsub.f32 %v293, %v974
        %v976 = vand.u32 %v975, 4294901760
        %977 = vmatpush1.msra.mxu0 %v976
        %978 = vmatprep.subr.mxu0 0.0
        %v979 = vand.u32 %v294, 4294901760
        %v980 = vsub.f32 %v294, %v979
        %v981 = vand.u32 %v980, 4294901760
        %982 = vmatpush1.msra.mxu0 %v981
        %983 = vmatprep.subr.mxu0 0.0
        %v984 = vand.u32 %v295, 4294901760
        %v985 = vsub.f32 %v295, %v984
        %v986 = vand.u32 %v985, 4294901760
        %987 = vmatpush1.msra.mxu0 %v986
        %988 = vmatprep.subr.mxu0 0.0
        %v989 = vand.u32 %v296, 4294901760
        %v990 = vsub.f32 %v296, %v989
        %v991 = vand.u32 %v990, 4294901760
        %992 = vmatpush1.msra.mxu0 %v991
        %993 = vmatprep.subr.mxu0 0.0
        %v994 = vand.u32 %v297, 4294901760
        %v995 = vsub.f32 %v297, %v994
        %v996 = vand.u32 %v995, 4294901760
        %997 = vmatpush1.msra.mxu0 %v996
        %998 = vmatprep.subr.mxu0 0.0
        %v999 = vand.u32 %v298, 4294901760
        %v1000 = vsub.f32 %v298, %v999
        %v1001 = vand.u32 %v1000, 4294901760
        %1002 = vmatpush1.msra.mxu0 %v1001
        %1003 = vmatprep.subr.mxu0 0.0
        %v1004 = vand.u32 %v299, 4294901760
        %v1005 = vsub.f32 %v299, %v1004
        %v1006 = vand.u32 %v1005, 4294901760
        %1007 = vmatpush1.msra.mxu0 %v1006
        %1008 = vmatprep.subr.mxu0 0.0
        %v1009 = vand.u32 %v300, 4294901760
        %v1010 = vsub.f32 %v300, %v1009
        %v1011 = vand.u32 %v1010, 4294901760
        %1012 = vmatpush1.msra.mxu0 %v1011
        %1013 = vmatprep.subr.mxu0 0.0
        %v1014 = vand.u32 %v301, 4294901760
        %v1015 = vsub.f32 %v301, %v1014
        %v1016 = vand.u32 %v1015, 4294901760
        %1017 = vmatpush1.msra.mxu0 %v1016
        %1018 = vmatprep.subr.mxu0 0.0
        %v1019 = vand.u32 %v302, 4294901760
        %v1020 = vsub.f32 %v302, %v1019
        %v1021 = vand.u32 %v1020, 4294901760
        %1022 = vmatpush1.msra.mxu0 %v1021
        %1023 = vmatprep.subr.mxu0 0.0
        %v1024 = vand.u32 %v303, 4294901760
        %v1025 = vsub.f32 %v303, %v1024
        %v1026 = vand.u32 %v1025, 4294901760
        %1027 = vmatpush1.msra.mxu0 %v1026
        %1028 = vmatprep.subr.mxu0 0.0
        %v1029 = vand.u32 %v304, 4294901760
        %v1030 = vsub.f32 %v304, %v1029
        %v1031 = vand.u32 %v1030, 4294901760
        %1032 = vmatpush1.msra.mxu0 %v1031
        %1033 = vmatprep.subr.mxu0 0.0
        %v1034 = vand.u32 %v305, 4294901760
        %v1035 = vsub.f32 %v305, %v1034
        %v1036 = vand.u32 %v1035, 4294901760
        %1037 = vmatpush1.msra.mxu0 %v1036
        %1038 = vmatprep.subr.mxu0 0.0
        %v1039 = vand.u32 %v306, 4294901760
        %v1040 = vsub.f32 %v306, %v1039
        %v1041 = vand.u32 %v1040, 4294901760
        %1042 = vmatpush1.msra.mxu0 %v1041
        %1043 = vmatprep.subr.mxu0 0.0
        %v1044 = vand.u32 %v307, 4294901760
        %v1045 = vsub.f32 %v307, %v1044
        %v1046 = vand.u32 %v1045, 4294901760
        %1047 = vmatpush1.msra.mxu0 %v1046
        %1048 = vmatprep.subr.mxu0 0.0
        %v1049 = vand.u32 %v308, 4294901760
        %v1050 = vsub.f32 %v308, %v1049
        %v1051 = vand.u32 %v1050, 4294901760
        %1052 = vmatpush1.msra.mxu0 %v1051
        %1053 = vmatprep.subr.mxu0 0.0
        %v1054 = vand.u32 %v309, 4294901760
        %v1055 = vsub.f32 %v309, %v1054
        %v1056 = vand.u32 %v1055, 4294901760
        %1057 = vmatpush1.msra.mxu0 %v1056
        %1058 = vmatprep.subr.mxu0 0.0
        %v1059 = vand.u32 %v310, 4294901760
        %v1060 = vsub.f32 %v310, %v1059
        %v1061 = vand.u32 %v1060, 4294901760
        %1062 = vmatpush1.msra.mxu0 %v1061
        %1063 = vmatprep.subr.mxu0 0.0
        %v1064 = vand.u32 %v311, 4294901760
        %v1065 = vsub.f32 %v311, %v1064
        %v1066 = vand.u32 %v1065, 4294901760
        %1067 = vmatpush1.msra.mxu0 %v1066
        %1068 = vmatprep.subr.mxu0 0.0
        %v1069 = vand.u32 %v312, 4294901760
        %v1070 = vsub.f32 %v312, %v1069
        %v1071 = vand.u32 %v1070, 4294901760
        %1072 = vmatpush1.msra.mxu0 %v1071
        %1073 = vmatprep.subr.mxu0 0.0
        %v1074 = vand.u32 %v313, 4294901760
        %v1075 = vsub.f32 %v313, %v1074
        %v1076 = vand.u32 %v1075, 4294901760
        %1077 = vmatpush1.msra.mxu0 %v1076
        %1078 = vmatprep.subr.mxu0 0.0
        %v1079 = vand.u32 %v314, 4294901760
        %v1080 = vsub.f32 %v314, %v1079
        %v1081 = vand.u32 %v1080, 4294901760
        %1082 = vmatpush1.msra.mxu0 %v1081
        %1083 = vmatprep.subr.mxu0 0.0
        %v1084 = vand.u32 %v315, 4294901760
        %v1085 = vsub.f32 %v315, %v1084
        %v1086 = vand.u32 %v1085, 4294901760
        %1087 = vmatpush1.msra.mxu0 %v1086
        %1088 = vmatprep.subr.mxu0 0.0
        %v1089 = vand.u32 %v316, 4294901760
        %v1090 = vsub.f32 %v316, %v1089
        %v1091 = vand.u32 %v1090, 4294901760
        %1092 = vmatpush1.msra.mxu0 %v1091
        %1093 = vmatprep.subr.mxu0 0.0
        %v1094 = vand.u32 %v317, 4294901760
        %v1095 = vsub.f32 %v317, %v1094
        %v1096 = vand.u32 %v1095, 4294901760
        %1097 = vmatpush1.msra.mxu0 %v1096
        %1098 = vmatprep.subr.mxu0 0.0
        %v1099 = vand.u32 %v318, 4294901760
        %v1100 = vsub.f32 %v318, %v1099
        %v1101 = vand.u32 %v1100, 4294901760
        %1102 = vmatpush1.msra.mxu0 %v1101
        %1103 = vmatprep.subr.mxu0 0.0
        %v1104 = vand.u32 %v319, 4294901760
        %v1105 = vsub.f32 %v319, %v1104
        %v1106 = vand.u32 %v1105, 4294901760
        %1107 = vmatpush1.msra.mxu0 %v1106
        %1108 = vmatprep.subr.mxu0 0.0
        %v1109 = vand.u32 %v320, 4294901760
        %v1110 = vsub.f32 %v320, %v1109
        %v1111 = vand.u32 %v1110, 4294901760
        %1112 = vmatpush1.msra.mxu0 %v1111
        %v1113 = vand.u32 %v284, 4294901760
        %1114 = vmatprep.mubr.f32.mxu0 %v1113
        %v1115 = vand.u32 %v283, 4294901760
        %1116 = vmatmul.mubr.f32.gmra.mrb[0].mxu0 %v1115
        %v1117 = vpop.f32.mrb[0].mxu0
        %v1118 = vadd.f32 %v939, %v1117
        %v1119 = vpop.f32.mrb[0].mxu0
        %v1120 = vand.u32 %v286, 4294901760
        %1121 = vmatprep.mubr.f32.mxu0 %v1120
        %v1122 = vand.u32 %v285, 4294901760
        %1123 = vmatmul.mubr.f32.gmra.mrb[0].mxu0 %v1122
        %v1124 = vpop.f32.mrb[0].mxu0
        %v1125 = vadd.f32 %v950, %v1124
        %v1126 = vpop.f32.mrb[0].mxu0
        %1127 = vdwg.mxu0
        %1128 = vmatprep.subr.mxu0 0.0
        %v1129 = vand.u32 %v289, 4294901760
        %1130 = vmatpush1.msra.mxu0 %v1129
        %1131 = vmatprep.subr.mxu0 0.0
        %v1132 = vand.u32 %v290, 4294901760
        %1133 = vmatpush1.msra.mxu0 %v1132
        %1134 = vmatprep.subr.mxu0 0.0
        %v1135 = vand.u32 %v291, 4294901760
        %1136 = vmatpush1.msra.mxu0 %v1135
        %1137 = vmatprep.subr.mxu0 0.0
        %v1138 = vand.u32 %v292, 4294901760
        %1139 = vmatpush1.msra.mxu0 %v1138
        %1140 = vmatprep.subr.mxu0 0.0
        %v1141 = vand.u32 %v293, 4294901760
        %1142 = vmatpush1.msra.mxu0 %v1141
        %1143 = vmatprep.subr.mxu0 0.0
        %v1144 = vand.u32 %v294, 4294901760
        %1145 = vmatpush1.msra.mxu0 %v1144
        %1146 = vmatprep.subr.mxu0 0.0
        %v1147 = vand.u32 %v295, 4294901760
        %1148 = vmatpush1.msra.mxu0 %v1147
        %1149 = vmatprep.subr.mxu0 0.0
        %v1150 = vand.u32 %v296, 4294901760
        %1151 = vmatpush1.msra.mxu0 %v1150
        %1152 = vmatprep.subr.mxu0 0.0
        %v1153 = vand.u32 %v297, 4294901760
        %1154 = vmatpush1.msra.mxu0 %v1153
        %1155 = vmatprep.subr.mxu0 0.0
        %v1156 = vand.u32 %v298, 4294901760
        %1157 = vmatpush1.msra.mxu0 %v1156
        %1158 = vmatprep.subr.mxu0 0.0
        %v1159 = vand.u32 %v299, 4294901760
        %1160 = vmatpush1.msra.mxu0 %v1159
        %1161 = vmatprep.subr.mxu0 0.0
        %v1162 = vand.u32 %v300, 4294901760
        %1163 = vmatpush1.msra.mxu0 %v1162
        %1164 = vmatprep.subr.mxu0 0.0
        %v1165 = vand.u32 %v301, 4294901760
        %1166 = vmatpush1.msra.mxu0 %v1165
        %1167 = vmatprep.subr.mxu0 0.0
        %v1168 = vand.u32 %v302, 4294901760
        %1169 = vmatpush1.msra.mxu0 %v1168
        %1170 = vmatprep.subr.mxu0 0.0
        %v1171 = vand.u32 %v303, 4294901760
        %1172 = vmatpush1.msra.mxu0 %v1171
        %1173 = vmatprep.subr.mxu0 0.0
        %v1174 = vand.u32 %v304, 4294901760
        %1175 = vmatpush1.msra.mxu0 %v1174
        %1176 = vmatprep.subr.mxu0 0.0
        %v1177 = vand.u32 %v305, 4294901760
        %1178 = vmatpush1.msra.mxu0 %v1177
        %1179 = vmatprep.subr.mxu0 0.0
        %v1180 = vand.u32 %v306, 4294901760
        %1181 = vmatpush1.msra.mxu0 %v1180
        %1182 = vmatprep.subr.mxu0 0.0
        %v1183 = vand.u32 %v307, 4294901760
        %1184 = vmatpush1.msra.mxu0 %v1183
        %1185 = vmatprep.subr.mxu0 0.0
        %v1186 = vand.u32 %v308, 4294901760
        %1187 = vmatpush1.msra.mxu0 %v1186
        %1188 = vmatprep.subr.mxu0 0.0
        %v1189 = vand.u32 %v309, 4294901760
        %1190 = vmatpush1.msra.mxu0 %v1189
        %1191 = vmatprep.subr.mxu0 0.0
        %v1192 = vand.u32 %v310, 4294901760
        %1193 = vmatpush1.msra.mxu0 %v1192
        %1194 = vmatprep.subr.mxu0 0.0
        %v1195 = vand.u32 %v311, 4294901760
        %1196 = vmatpush1.msra.mxu0 %v1195
        %1197 = vmatprep.subr.mxu0 0.0
        %v1198 = vand.u32 %v312, 4294901760
        %1199 = vmatpush1.msra.mxu0 %v1198
        %1200 = vmatprep.subr.mxu0 0.0
        %v1201 = vand.u32 %v313, 4294901760
        %1202 = vmatpush1.msra.mxu0 %v1201
        %1203 = vmatprep.subr.mxu0 0.0
        %v1204 = vand.u32 %v314, 4294901760
        %1205 = vmatpush1.msra.mxu0 %v1204
        %1206 = vmatprep.subr.mxu0 0.0
        %v1207 = vand.u32 %v315, 4294901760
        %1208 = vmatpush1.msra.mxu0 %v1207
        %1209 = vmatprep.subr.mxu0 0.0
        %v1210 = vand.u32 %v316, 4294901760
        %1211 = vmatpush1.msra.mxu0 %v1210
        %1212 = vmatprep.subr.mxu0 0.0
        %v1213 = vand.u32 %v317, 4294901760
        %1214 = vmatpush1.msra.mxu0 %v1213
        %1215 = vmatprep.subr.mxu0 0.0
        %v1216 = vand.u32 %v318, 4294901760
        %1217 = vmatpush1.msra.mxu0 %v1216
        %1218 = vmatprep.subr.mxu0 0.0
        %v1219 = vand.u32 %v319, 4294901760
        %1220 = vmatpush1.msra.mxu0 %v1219
        %1221 = vmatprep.subr.mxu0 0.0
        %v1222 = vand.u32 %v320, 4294901760
        %1223 = vmatpush1.msra.mxu0 %v1222
        %v1224 = vand.u32 %v284, 4294901760
        %1225 = vmatprep.mubr.f32.mxu0 %v1224
        %v1226 = vand.u32 %v283, 4294901760
        %1227 = vmatmul.mubr.f32.gmra.mrb[0].mxu0 %v1226
        %v1228 = vpop.f32.mrb[0].mxu0
        %v1229 = vadd.f32 %v1118, %v1228
        %v1230 = vpop.f32.mrb[0].mxu0
        %v1231 = vand.u32 %v286, 4294901760
        %1232 = vmatprep.mubr.f32.mxu0 %v1231
        %v1233 = vand.u32 %v285, 4294901760
        %1234 = vmatmul.mubr.f32.gmra.mrb[0].mxu0 %v1233
        %v1235 = vpop.f32.mrb[0].mxu0
        %v1236 = vadd.f32 %v1125, %v1235
        %v1237 = vpop.f32.mrb[0].mxu0
        %1238 = vdwg.mxu0
        %v1239 = vadd.f32 %v287, %v1229
        %v1240 = vadd.f32 %v288, %v1236
        %1241 = vst [vmem:[#allocation2] sm:$0xff] %v1239
        %1242 = vst [vmem:[#allocation2 + $0x8] sm:$0xff] %v1240
        // Predicated region
        $region49: #{tpu_custom_call.1} parent=31 // pred_check
          %p1243 = pneg %p272
        $region50: #{tpu_custom_call.1} parent=31 // pred_check_branch
          %1245 = sbr.rel (%p1243) target = $region52
        $region51: #{tpu_custom_call.1} parent=31 // pred_region
          %v1246 = vld [vmem:[#allocation2] sm:$0xff]
          %v1247 = vld [vmem:[#allocation2 + $0x8] sm:$0xff]
          %v1248 = vld [vmem:[%s242] sm:$0x1]
          %v1250 = vlaneseq
          %v1251 = vshrl.u32 %v1250, 7
          %v1252 = vsub.s32 0, %v1251
          %v1253 = vrot.slane %v1248, %v1252
          %v1255 = vadd.f32 %v1246, %v1253
          %v1256 = vadd.f32 %v1247, %v1253
          %1257 = vst [vmem:[%s268] sm:$0xff] %v1255
          %1258 = vst [vmem:[%s268 + $0x8] sm:$0xff] %v1256
        $region52: #{tpu_custom_call.1} parent=31 // pred_fallthru
          _
        %s1259 = sand.u32 %s130, 1
        %s1260 = scalar_lea.sflag [#allocation5], %s1259
        %s1261 = sand.u32 %s130, 1
        %s1262 = smul.addr %s1261, 16
        %s1263 = scalar_lea.vmem [#allocation9], %s1262
        // Predicated region
        $region53: #{tpu_custom_call.1} parent=31 // pred_check
          %p1264 = pneg %p140
        $region54: #{tpu_custom_call.1} parent=31 // pred_check_branch
          %1266 = sbr.rel (%p1264) target = $region56
        $region55: #{tpu_custom_call.1} parent=31 // pred_region
          %s1267 = smul.u32 2, %s26
          %s1269 = ssub.s32 256, 256
          %1270 = vsyncadd %s1260, %s1269
          %s1271 = smul.addr %s1267, 2
          %s1272 = sadd.s32 %s27, %s1271
          %s1273 = smul.addr %s1272, 128
          %s1274 = scalar_lea.hbm %s3, %s1273
          %s1275 = sshll.u32 %s1263, 4
          %s1276 = int_to_ptr.vmem [resolvable:$true] %s1275
          %1281 = dma.vmem_to_hbm [thread:$0]  %s1276, 256, %s1274, %s1260, 128, 256, 8
        $region56: #{tpu_custom_call.1} parent=31 // pred_fallthru
          _
      $region32: #{tpu_custom_call.1} parent=5 // pred_fallthru
        _
      %p1282 = scmp.le.s32.totalorder 2, %s16
      // Predicated region
      $region57: #{tpu_custom_call.1} parent=5 // pred_check
        %p1283 = pneg %p1282
      $region58: #{tpu_custom_call.1} parent=5 // pred_check_branch
        %1285 = sbr.rel (%p1283) target = $region60
      $region59: #{tpu_custom_call.1} parent=5 // pred_region
        %s1286 = ssub.s32 %s16, 2
        // Predicated region
        $region61: #{tpu_custom_call.1} parent=59 // pred_check
          %p1287 = pneg %p146
        $region62: #{tpu_custom_call.1} parent=59 // pred_check_branch
          %1289 = sbr.rel (%p1287) target = $region64
        $region63: #{tpu_custom_call.1} parent=59 // pred_region
          %s1290 = sand.u32 %s131, 1
          %s1291 = scalar_lea.sflag [#allocation5], %s1290
          %s1292 = sand.u32 %s131, 1
          %s1293 = smul.addr %s1292, 16
          %s1294 = scalar_lea.vmem [#allocation9], %s1293
          %1295 = dma.done %s1291, 256
        $region64: #{tpu_custom_call.1} parent=59 // pred_fallthru
          _
      $region60: #{tpu_custom_call.1} parent=5 // pred_fallthru
        _
    $region6: #{tpu_custom_call.1} parent=1 // loop_footer
      %s20 = sadd.s32 1, %s16
    $region7: #{tpu_custom_call.1} parent=1 // loop_footer_branch
      %15 = sbr.rel target = $region3
    $region8: #{tpu_custom_call.1} parent=1 // loop_exit
      _
    %1296 = vsyncpa [#allocation4], 1
    %s1297 = scalar_lea.sflag [#allocation4], 1
    %1298 = vsyncpa %s1297, 1
    %1299 = vsyncpa [#allocation7], 1
    %s1300 = scalar_lea.sflag [#allocation7], 1
    %1301 = vsyncpa %s1300, 1
    %1302 = vsyncpa [#allocation5], 1
    %s1303 = scalar_lea.sflag [#allocation5], 1
    %1304 = vsyncpa %s1303, 1

</llo_original>
